<compile_context>
chip_gen: v7x
topology: tpu7x:2x2x1
jax: 0.10.0
libtpu: 0.0.40
codegen_flags: <defaults>
</compile_context>

<pallas_src>
import jax
import jax.numpy as jnp
import numpy as np
from jax.experimental import pallas as pl
from jax.experimental.pallas import tpu as pltpu


def abs_embedding_kernel(emb_ref, x_ref, o_ref):
    # emb_ref: (TS, D) block of the positional table.
    # x_ref / o_ref: (1, TS, D) block of one batch element's sequence tile.
    o_ref[...] = (x_ref[...] + emb_ref[...].astype(x_ref.dtype)).astype(o_ref.dtype)


def _choose_seq_tile(S, D, itemsize, target_bytes=2 << 20):
    # Multiple-of-8 row count giving ~target_bytes per (TS, D) x block,
    # capped at the full sequence length (full-extent blocks are always legal).
    rows = max(8, ((target_bytes // max(D * itemsize, 1)) // 8) * 8)
    return int(min(S, rows))


def abs_embedding(x, embedding, *, seq_tile=None):
    """out[b, s, d] = x[b, s, d] + embedding[s, d]."""
    B, S, D = x.shape
    assert embedding.shape == (S, D), (embedding.shape, (S, D))

    ts = seq_tile if seq_tile is not None else _choose_seq_tile(S, D, x.dtype.itemsize)
    ts = int(min(ts, S))
    grid = (pl.cdiv(S, ts), B)  # batch innermost -> embedding tile reused across B

    emb_spec = pl.BlockSpec((ts, D), lambda s, b: (s, 0))
    x_spec = pl.BlockSpec((1, ts, D), lambda s, b: (b, s, 0))

    return pl.pallas_call(
        abs_embedding_kernel,
        out_shape=jax.ShapeDtypeStruct(x.shape, x.dtype),
        grid_spec=pltpu.PrefetchScalarGridSpec(
            num_scalar_prefetch=0,
            grid=grid,
            in_specs=[emb_spec, x_spec],
            out_specs=x_spec,
        ),
        compiler_params=pltpu.CompilerParams(
            dimension_semantics=("parallel", "parallel")),
    )(embedding, x)


if __name__ == "__main__":
    key = jax.random.PRNGKey(0)
    k_emb, k_x, k_emb2, k_x2 = jax.random.split(key, 4)

    # Small shape implied by the module: batch=2, seq_len=8, dim=32.
    B, S, D = 2, 8, 32
    emb = jax.random.normal(k_emb, (S, D), dtype=jnp.float32)
    x = jax.random.normal(k_x, (B, S, D), dtype=jnp.float32)

    out = jax.block_until_ready(abs_embedding(x, emb))
    ref = np.asarray(x) + np.asarray(emb)[None]
    assert np.allclose(np.asarray(out), ref, atol=1e-6, rtol=1e-6)

    # Also exercise the S-tiled multi-block grid path at a modest size.
    B2, S2, D2 = 2, 1024, 128
    emb2 = jax.random.normal(k_emb2, (S2, D2), dtype=jnp.float32)
    x2 = jax.random.normal(k_x2, (B2, S2, D2), dtype=jnp.float32)

    out2 = jax.block_until_ready(abs_embedding(x2, emb2, seq_tile=256))
    ref2 = np.asarray(x2) + np.asarray(emb2)[None]
    assert np.allclose(np.asarray(out2), ref2, atol=1e-6, rtol=1e-6)

    print("KERNEL_OK")
</pallas_src>

<mosaic_0001>
module attributes {stable_mosaic.version = 11 : i64} {
  func.func @abs_embedding_kernel(%arg0: i32, %arg1: i32, %arg2: memref<8x32xf32, #tpu.memory_space<vmem>>, %arg3: memref<1x8x32xf32, #tpu.memory_space<vmem>>, %arg4: memref<1x8x32xf32, #tpu.memory_space<vmem>>) attributes {dimension_semantics = [#tpu.dimension_semantics<parallel>, #tpu.dimension_semantics<parallel>], iteration_bounds = array<i64: 1, 2>, scalar_prefetch = 0 : i64, scratch_operands = 0 : i64, tpu.core_type = #tpu.core_type<tc>, window_params = [{transform_indices = @transform_0, window_bounds = array<i64: 8, 32>}, {transform_indices = @transform_1, window_bounds = array<i64: 1, 8, 32>}, {transform_indices = @transform_2, window_bounds = array<i64: 1, 8, 32>}]} {
    %c0 = arith.constant 0 : index
    %c0_0 = arith.constant 0 : index
    %c0_1 = arith.constant 0 : index
    %0 = vector.load %arg3[%c0, %c0_0, %c0_1] : memref<1x8x32xf32, #tpu.memory_space<vmem>>, vector<1x8x32xf32>
    %c0_2 = arith.constant 0 : index
    %c0_3 = arith.constant 0 : index
    %1 = vector.load %arg2[%c0_2, %c0_3] : memref<8x32xf32, #tpu.memory_space<vmem>>, vector<8x32xf32>
    %2 = vector.shape_cast %1 : vector<8x32xf32> to vector<1x8x32xf32>
    %3 = arith.addf %0, %2 : vector<1x8x32xf32>
    %c0_4 = arith.constant 0 : index
    %c0_5 = arith.constant 0 : index
    %c0_6 = arith.constant 0 : index
    %4 = vector.load %arg4[%c0_4, %c0_5, %c0_6] : memref<1x8x32xf32, #tpu.memory_space<vmem>>, vector<1x8x32xf32>
    tpu.vector_store %arg4[%c0_4, %c0_5, %c0_6], %3 {strides = array<i32>} : memref<1x8x32xf32, #tpu.memory_space<vmem>>, vector<1x8x32xf32>,
    return
  }
  func.func @transform_0(%arg0: i32, %arg1: i32) -> (i32, i32) {
    %c0_i32 = arith.constant 0 : i32
    %c0_i32_0 = arith.constant 0 : i32
    return %arg0, %c0_i32 : i32, i32
  }
  func.func @transform_1(%arg0: i32, %arg1: i32) -> (i32, i32, i32) {
    %c0_i32 = arith.constant 0 : i32
    %c0_i32_0 = arith.constant 0 : i32
    return %arg1, %arg0, %c0_i32 : i32, i32, i32
  }
  func.func @transform_2(%arg0: i32, %arg1: i32) -> (i32, i32, i32) {
    %c0_i32 = arith.constant 0 : i32
    %c0_i32_0 = arith.constant 0 : i32
    return %arg1, %arg0, %c0_i32 : i32, i32, i32
  }
}

</mosaic_0001>

<llo_original>
// kernel: tpu_custom_call.1
$region0: #{tpu_custom_call.1}
  #allocation0 [shape = 'u32[]', space=smem, size = 0x4, offset = 0x4, fixed_abs, tag = 'smem constant byte address 0x4 - core index']
  #allocation1 [shape = 'u32[144,128]{1,0:T(1,128)}', space=vmem, size = 0x12000, scoped, tag = 'internal scratch']
  %s0 = inlined_call_operand.hbm [shape: f32[8,32], index: 0, kind: input, shape index: {}]
  %s1 = inlined_call_operand.hbm [shape: f32[2,8,32], index: 1, kind: input, shape index: {}]
  %s2 = inlined_call_operand.hbm [shape: f32[2,8,32], index: 2, kind: output, shape index: {}]
  %s3 = sld [smem:[#allocation0]]
  $region49: #{tpu_custom_call.1} parent=0
    _
  %s5 = ssub.s32 1, %s3
  %s6 = scalar_select 0, %s5, %s3
  $region1: #{tpu_custom_call.1} parent=0
    #allocation2 [shape = 'u8[4096]{0}', space=vmem, size = 0x1000, scoped, tag = 'input window, operand 0, single buffered']
    #allocation3 [shape = 's32[2]{0}', space=sflag, size = 0x8, scoped, tag = 'scoped memory for tpu_custom_call.1']
    #allocation4 [shape = 's32[2]{0}', space=sflag, size = 0x8, scoped, tag = 'scoped memory for tpu_custom_call.1']
    #allocation5 [shape = 'u8[8192]{0}', space=vmem, size = 0x2000, scoped, tag = 'input window, operand 1']
    #allocation6 [shape = 's32[2]{0}', space=sflag, size = 0x8, scoped, tag = 'scoped memory for tpu_custom_call.1']
    #allocation7 [shape = 'u8[8192]{0}', space=vmem, size = 0x2000, scoped, tag = 'output window, operand 0']
    %7 = vsyncpa [#allocation3], 0
    %8 = vsyncpa [#allocation6], 0
    %s9 = scalar_lea.sflag [#allocation6], 1
    %10 = vsyncpa %s9, 0
    %11 = vsyncpa [#allocation4], 0
    %s12 = scalar_lea.sflag [#allocation4], 1
    %13 = vsyncpa %s12, 0
    loop: start=0, step=1, limit=4
    $region2: #{tpu_custom_call.1} parent=1 // loop_pre_header
      _
    $region3: #{tpu_custom_call.1} parent=1 // loop_header
      %s15 = sphi 0, %s19
      %p16 = scmp.ge.s32.totalorder %s15, 4
      %s22 = sphi 0, %s34
      %s23 = sphi 0, %s30
      %s24 = sphi 0, %s22
      %s25 = sphi 0, %s23
      %s26 = sphi 0, %s24
      %s27 = sphi 0, %s25
      %s37 = sphi 0, %s39
      %s40 = sphi 0, %s37
      %s41 = sphi 0, %s40
      %s57 = sphi 0, %s41
      %s65 = sphi 0, %s67
      %s68 = sphi 0, %s65
      %s69 = sphi 0, %s68
      %s85 = sphi 0, %s69
      %s93 = sphi 0, %s95
      %s96 = sphi 0, %s93
      %s97 = sphi 0, %s96
      %s113 = sphi 0, %s97
    $region4: #{tpu_custom_call.1} parent=1 // loop_header_branch
      %18 = sbr.rel (%p16) target = $region8
    $region5: #{tpu_custom_call.1} parent=1 // loop_body
      %s20 = ssub.s32 %s15, 1
      %s21 = ssub.s32 %s15, 2
      %s28 = sadd.s32 1, %s23
      %p29 = scmp.ge.s32.totalorder %s28, 2
      %s30 = scalar_select %p29, 0, %s28
      %s31 = sadd.s32 1, %s22
      %s32 = scalar_select %p29, %s31, %s22
      %p33 = scmp.ge.s32.totalorder %s32, 1
      %s34 = scalar_select %p33, 0, %s32
      %s35 = ssub.s32 %s22, %s34
      %p36 = scmp.eq.s32.totalorder %s35, 0
      %s38 = sadd.s32 %s37, 1
      %s39 = scalar_select %p36, %s37, %s38
      %p42 = pneg %p36
      %p43 = scmp.eq.s32.totalorder %s15, 1
      %p44 = por %p42, %p43
      %p45 = scmp.ne.s32.totalorder %s37, %s40
      %p46 = scmp.eq.s32.totalorder %s15, 0
      %p47 = por %p45, %p46
      %p48 = scmp.ne.s32.totalorder %s37, %s40
      %p49 = scmp.eq.s32.totalorder %s20, 1
      %p50 = por %p48, %p49
      %p51 = scmp.ne.s32.totalorder %s40, %s41
      %p52 = scmp.eq.s32.totalorder %s20, 0
      %p53 = por %p51, %p52
      %p54 = scmp.ne.s32.totalorder %s40, %s41
      %p55 = scmp.eq.s32.totalorder %s21, 1
      %p56 = por %p54, %p55
      %p58 = scmp.ne.s32.totalorder %s41, %s57
      %p59 = scmp.eq.s32.totalorder %s21, 0
      %p60 = por %p58, %p59
      %s61 = ssub.s32 %s23, %s30
      %s62 = ssub.s32 %s22, %s34
      %s63 = sor.u32 %s61, %s62
      %p64 = scmp.eq.s32.totalorder %s63, 0
      %s66 = sadd.s32 %s65, 1
      %s67 = scalar_select %p64, %s65, %s66
      %p70 = pneg %p64
      %p71 = scmp.eq.s32.totalorder %s15, 1
      %p72 = por %p70, %p71
      %p73 = scmp.ne.s32.totalorder %s65, %s68
      %p74 = scmp.eq.s32.totalorder %s15, 0
      %p75 = por %p73, %p74
      %p76 = scmp.ne.s32.totalorder %s65, %s68
      %p77 = scmp.eq.s32.totalorder %s20, 1
      %p78 = por %p76, %p77
      %p79 = scmp.ne.s32.totalorder %s68, %s69
      %p80 = scmp.eq.s32.totalorder %s20, 0
      %p81 = por %p79, %p80
      %p82 = scmp.ne.s32.totalorder %s68, %s69
      %p83 = scmp.eq.s32.totalorder %s21, 1
      %p84 = por %p82, %p83
      %p86 = scmp.ne.s32.totalorder %s69, %s85
      %p87 = scmp.eq.s32.totalorder %s21, 0
      %p88 = por %p86, %p87
      %s89 = ssub.s32 %s23, %s30
      %s90 = ssub.s32 %s22, %s34
      %s91 = sor.u32 %s89, %s90
      %p92 = scmp.eq.s32.totalorder %s91, 0
      %s94 = sadd.s32 %s93, 1
      %s95 = scalar_select %p92, %s93, %s94
      %p98 = pneg %p92
      %p99 = scmp.eq.s32.totalorder %s15, 1
      %p100 = por %p98, %p99
      %p101 = scmp.ne.s32.totalorder %s93, %s96
      %p102 = scmp.eq.s32.totalorder %s15, 0
      %p103 = por %p101, %p102
      %p104 = scmp.ne.s32.totalorder %s93, %s96
      %p105 = scmp.eq.s32.totalorder %s20, 1
      %p106 = por %p104, %p105
      %p107 = scmp.ne.s32.totalorder %s96, %s97
      %p108 = scmp.eq.s32.totalorder %s20, 0
      %p109 = por %p107, %p108
      %p110 = scmp.ne.s32.totalorder %s96, %s97
      %p111 = scmp.eq.s32.totalorder %s21, 1
      %p112 = por %p110, %p111
      %p114 = scmp.ne.s32.totalorder %s97, %s113
      %p115 = scmp.eq.s32.totalorder %s21, 0
      %p116 = por %p114, %p115
      %p117 = scmp.le.s32.totalorder 1, %s15
      %p118 = scmp.lt.s32.totalorder %s15, 3
      %p119 = pnand %p117, %p118
      %p120 = pneg %p119
      // Predicated region
      $region9: #{tpu_custom_call.1} parent=5 // pred_check
        _
      $region10: #{tpu_custom_call.1} parent=5 // pred_check_branch
        %122 = sbr.rel (%p119) target = $region12
      $region11: #{tpu_custom_call.1} parent=5 // pred_region
        %s123 = ssub.s32 %s15, 1
        // Predicated region
        $region13: #{tpu_custom_call.1} parent=11 // pred_check
          %p124 = pneg %p53
        $region14: #{tpu_custom_call.1} parent=11 // pred_check_branch
          %126 = sbr.rel (%p124) target = $region16
        $region15: #{tpu_custom_call.1} parent=11 // pred_region
          %s128 = ssub.s32 128, 128
          %129 = vsyncadd [#allocation3], %s128
          %s130 = smul.addr %s24, 128
          %s131 = scalar_lea.hbm %s0, %s130
          %s133 = sshll.u32 [#allocation2], 4
          %s134 = int_to_ptr.vmem [resolvable:$true] %s133
          %136 = dma.hbm_to_vmem [thread:$0]  %s131, 128, %s134, [#allocation3]
        $region16: #{tpu_custom_call.1} parent=11 // pred_fallthru
          _
      $region12: #{tpu_custom_call.1} parent=5 // pred_fallthru
        _
      %p137 = scmp.lt.s32.totalorder %s15, 2
      // Predicated region
      $region17: #{tpu_custom_call.1} parent=5 // pred_check
        %p138 = pneg %p137
      $region18: #{tpu_custom_call.1} parent=5 // pred_check_branch
        %140 = sbr.rel (%p138) target = $region20
      $region19: #{tpu_custom_call.1} parent=5 // pred_region
        // Predicated region
        $region21: #{tpu_custom_call.1} parent=19 // pred_check
          %p141 = pneg %p75
        $region22: #{tpu_custom_call.1} parent=19 // pred_check_branch
          %143 = sbr.rel (%p141) target = $region24
        $region23: #{tpu_custom_call.1} parent=19 // pred_region
          %s144 = sand.u32 %s65, 1
          %s145 = scalar_lea.sflag [#allocation6], %s144
          %s146 = sand.u32 %s65, 1
          %s147 = smul.addr %s146, 8
          %s148 = scalar_lea.vmem [#allocation5], %s147
          %s150 = ssub.s32 128, 128
          %151 = vsyncadd %s145, %s150
          %s152 = sadd.s32 %s22, %s23
          %s153 = smul.addr %s152, 128
          %s154 = scalar_lea.hbm %s1, %s153
          %s156 = sshll.u32 %s148, 4
          %s157 = int_to_ptr.vmem [resolvable:$true] %s156
          %159 = dma.hbm_to_vmem [thread:$0]  %s154, 128, %s157, %s145
        $region24: #{tpu_custom_call.1} parent=19 // pred_fallthru
          _
      $region20: #{tpu_custom_call.1} parent=5 // pred_fallthru
        _
      %p160 = scmp.le.s32.totalorder 1, %s15
      %p161 = scmp.lt.s32.totalorder %s15, 3
      %p162 = pnand %p160, %p161
      %p163 = pneg %p162
      // Predicated region
      $region25: #{tpu_custom_call.1} parent=5 // pred_check
        _
      $region26: #{tpu_custom_call.1} parent=5 // pred_check_branch
        %165 = sbr.rel (%p162) target = $region28
      $region27: #{tpu_custom_call.1} parent=5 // pred_region
        %s166 = ssub.s32 %s15, 1
        // Predicated region
        $region29: #{tpu_custom_call.1} parent=27 // pred_check
          %p167 = pneg %p53
        $region30: #{tpu_custom_call.1} parent=27 // pred_check_branch
          %169 = sbr.rel (%p167) target = $region32
        $region31: #{tpu_custom_call.1} parent=27 // pred_region
          %170 = dma.done [#allocation3], 128
        $region32: #{tpu_custom_call.1} parent=27 // pred_fallthru
          _
        %s171 = sand.u32 %s68, 1
        %s172 = scalar_lea.sflag [#allocation6], %s171
        %s173 = sand.u32 %s68, 1
        %s174 = smul.addr %s173, 8
        %s175 = scalar_lea.vmem [#allocation5], %s174
        // Predicated region
        $region33: #{tpu_custom_call.1} parent=27 // pred_check
          %p176 = pneg %p81
        $region34: #{tpu_custom_call.1} parent=27 // pred_check_branch
          %178 = sbr.rel (%p176) target = $region36
        $region35: #{tpu_custom_call.1} parent=27 // pred_region
          %179 = dma.done %s172, 128
        $region36: #{tpu_custom_call.1} parent=27 // pred_fallthru
          _
        %p180 = pneg %p53
        %p181 = pneg %p50
        %s182 = sand.u32 %s68, 1
        %s183 = scalar_lea.sflag [#allocation6], %s182
        %s184 = sand.u32 %s68, 1
        %s185 = smul.addr %s184, 8
        %s186 = scalar_lea.vmem [#allocation5], %s185
        %p187 = pneg %p81
        %p188 = pneg %p78
        %p189 = pneg %p109
        %p190 = pneg %p106
        %s191 = sand.u32 %s96, 1
        %s192 = scalar_lea.sflag [#allocation4], %s191
        %s193 = sand.u32 %s96, 1
        %s194 = smul.addr %s193, 8
        %s195 = scalar_lea.vmem [#allocation7], %s194
        %v196 = vld [vmem:[%s175] sm:$0xff]
        %v197 = vld [vmem:[#allocation2] sm:$0xff]
        %v198 = vadd.f32 %v196, %v197
        %vm199 = vcmask 261120
        %200 = vst.msk [vmem:[%s195] sm:$0xff] %vm199, %v198
        %s201 = sand.u32 %s96, 1
        %s202 = scalar_lea.sflag [#allocation4], %s201
        %s203 = sand.u32 %s96, 1
        %s204 = smul.addr %s203, 8
        %s205 = scalar_lea.vmem [#allocation7], %s204
        // Predicated region
        $region37: #{tpu_custom_call.1} parent=27 // pred_check
          %p206 = pneg %p106
        $region38: #{tpu_custom_call.1} parent=27 // pred_check_branch
          %208 = sbr.rel (%p206) target = $region40
        $region39: #{tpu_custom_call.1} parent=27 // pred_region
          %s210 = ssub.s32 128, 128
          %211 = vsyncadd %s202, %s210
          %s212 = sadd.s32 %s24, %s25
          %s213 = smul.addr %s212, 128
          %s214 = scalar_lea.hbm %s2, %s213
          %s216 = sshll.u32 %s205, 4
          %s217 = int_to_ptr.vmem [resolvable:$true] %s216
          %219 = dma.vmem_to_hbm [thread:$0]  %s217, 128, %s214, %s202
        $region40: #{tpu_custom_call.1} parent=27 // pred_fallthru
          _
      $region28: #{tpu_custom_call.1} parent=5 // pred_fallthru
        _
      %p220 = scmp.le.s32.totalorder 2, %s15
      // Predicated region
      $region41: #{tpu_custom_call.1} parent=5 // pred_check
        %p221 = pneg %p220
      $region42: #{tpu_custom_call.1} parent=5 // pred_check_branch
        %223 = sbr.rel (%p221) target = $region44
      $region43: #{tpu_custom_call.1} parent=5 // pred_region
        %s224 = ssub.s32 %s15, 2
        // Predicated region
        $region45: #{tpu_custom_call.1} parent=43 // pred_check
          %p225 = pneg %p112
        $region46: #{tpu_custom_call.1} parent=43 // pred_check_branch
          %227 = sbr.rel (%p225) target = $region48
        $region47: #{tpu_custom_call.1} parent=43 // pred_region
          %s228 = sand.u32 %s97, 1
          %s229 = scalar_lea.sflag [#allocation4], %s228
          %s230 = sand.u32 %s97, 1
          %s231 = smul.addr %s230, 8
          %s232 = scalar_lea.vmem [#allocation7], %s231
          %233 = dma.done %s229, 128
        $region48: #{tpu_custom_call.1} parent=43 // pred_fallthru
          _
      $region44: #{tpu_custom_call.1} parent=5 // pred_fallthru
        _
    $region6: #{tpu_custom_call.1} parent=1 // loop_footer
      %s19 = sadd.s32 1, %s15
    $region7: #{tpu_custom_call.1} parent=1 // loop_footer_branch
      %14 = sbr.rel target = $region3
    $region8: #{tpu_custom_call.1} parent=1 // loop_exit
      _
    %234 = vsyncpa [#allocation3], 1
    %s235 = scalar_lea.sflag [#allocation3], 1
    %236 = vsyncpa %s235, 1
    %237 = vsyncpa [#allocation6], 1
    %s238 = scalar_lea.sflag [#allocation6], 1
    %239 = vsyncpa %s238, 1
    %240 = vsyncpa [#allocation4], 1
    %s241 = scalar_lea.sflag [#allocation4], 1
    %242 = vsyncpa %s241, 1

</llo_original>
